<compile_context>
chip_gen: v7x
topology: tpu7x:2x2x1
jax: 0.10.0
libtpu: 0.0.40
codegen_flags: <defaults>
</compile_context>

<pallas_src>
import functools

import jax
import jax.numpy as jnp
from jax import lax
from jax.experimental import pallas as pl
from jax.experimental.pallas import tpu as pltpu


def _gru_kernel(x_ref, wih_ref, bi_ref, whh_ref, bhn_ref, h_out_ref, gi_ref,
                *, n_steps, b_pad, hidden):
    """Whole GRU forward in one invocation.

    x_ref  : (T*B, E)   time-major input (row block t*B:(t+1)*B is timestep t)
    wih_ref: (E, 3H)    W_ih^T, gate blocks r|z|n along lanes
    bi_ref : (1, 3H)    b_ih with the r/z hidden biases folded in
    whh_ref: (H, 3H)    W_hh^T, gate blocks r|z|n along lanes
    bhn_ref: (1, H)     hidden bias of the n gate (cannot be folded)
    h_out  : (B, H)     final hidden state
    gi_ref : (T*B, 3H)  VMEM scratch for the fused input projection
    """
    # Fused input projection for all timesteps: one MXU dot + one VPU add.
    gi_ref[...] = (
        jnp.dot(x_ref[...], wih_ref[...], preferred_element_type=jnp.float32)
        + bi_ref[...])

    w_all = whh_ref[...]          # (H, 3H), hoisted out of the time loop
    b_hn = bhn_ref[...]           # (1, H), broadcasts over batch

    h = jnp.zeros((b_pad, hidden), jnp.float32)

    # Fully-unrolled time loop (small static trip count). The recurrence is strictly
    # serial: one fused MXU push per step, gate math on the VPU/EUP, gi load overlaps.
    for t in range(n_steps):
        gi_t = gi_ref[t * b_pad:(t + 1) * b_pad, :]                   # (B, 3H) aligned tile
        gh = jnp.dot(h, w_all, preferred_element_type=jnp.float32)    # (B, 3H) single dot
        r = jax.nn.sigmoid(gi_t[:, :hidden] + gh[:, :hidden])
        z = jax.nn.sigmoid(gi_t[:, hidden:2 * hidden] + gh[:, hidden:2 * hidden])
        n = jnp.tanh(gi_t[:, 2 * hidden:] + r * (gh[:, 2 * hidden:] + b_hn))
        h = (1.0 - z) * n + z * h

    h_out_ref[...] = h.astype(h_out_ref.dtype)


def session_encoder_forward(x, w_ih, w_hh, b_ih, b_hh):
    """x: (B, T, E) float32 (batch_first, like nn.GRU(batch_first=True)).
    w_ih: (3H, E), w_hh: (3H, H), b_ih/b_hh: (3H,)  [PyTorch shapes, gate order r,z,n].
    Returns h[-1]: (B, H)."""
    B, T, E = x.shape
    H = w_hh.shape[1]
    H3 = 3 * H

    # Pad batch (sublane dim) up to a multiple of 8; padded rows are discarded at the end.
    B_pad = max(8, ((B + 7) // 8) * 8)
    x_pad = x if B_pad == B else jnp.pad(x, ((0, B_pad - B), (0, 0), (0, 0)))

    # Time-major, flattened over (t, b): row block t*B_pad:(t+1)*B_pad is timestep t.
    x_tm = jnp.transpose(x_pad, (1, 0, 2)).reshape(T * B_pad, E)

    # Gate-concatenated weights so one dot produces r|z|n along lanes.
    w_ih_t = w_ih.T                                   # (E, 3H)
    w_hh_t = w_hh.T                                   # (H, 3H)
    # Fold the r/z hidden biases into the input-projection bias.
    b_i_all = (b_ih + jnp.concatenate(
        [b_hh[:2 * H], jnp.zeros((H,), b_hh.dtype)])).reshape(1, H3)
    b_hn = b_hh[2 * H:].reshape(1, H)                 # n-gate hidden bias

    kernel = functools.partial(_gru_kernel, n_steps=T, b_pad=B_pad, hidden=H)

    grid_spec = pltpu.PrefetchScalarGridSpec(
        num_scalar_prefetch=0,
        grid=(1,),  # whole recurrence in one invocation; everything VMEM-resident
        in_specs=[
            pl.BlockSpec((T * B_pad, E), lambda i: (0, 0)),   # x (time-major, flattened)
            pl.BlockSpec((E, H3), lambda i: (0, 0)),          # W_ih^T
            pl.BlockSpec((1, H3), lambda i: (0, 0)),          # folded input bias
            pl.BlockSpec((H, H3), lambda i: (0, 0)),          # W_hh^T (gate-concat)
            pl.BlockSpec((1, H), lambda i: (0, 0)),           # b_hn
        ],
        out_specs=pl.BlockSpec((B_pad, H), lambda i: (0, 0)),
        scratch_shapes=[pltpu.VMEM((T * B_pad, H3), jnp.float32)],  # gi scratch
    )

    h_pad = pl.pallas_call(
        kernel,
        out_shape=jax.ShapeDtypeStruct((B_pad, H), x.dtype),
        grid_spec=grid_spec,
        compiler_params=pltpu.CompilerParams(
            dimension_semantics=("arbitrary",)),
    )(x_tm, w_ih_t, b_i_all, w_hh_t, b_hn)

    return h_pad[:B]


def _gru_reference(x, w_ih, w_hh, b_ih, b_hh):
    """Pure-JAX reference reproducing torch.nn.GRU forward (h[-1])."""
    B, T, E = x.shape
    H = w_hh.shape[1]

    def step(h, x_t):
        gi = x_t @ w_ih.T + b_ih
        gh = h @ w_hh.T + b_hh
        gi_r, gi_z, gi_n = gi[:, :H], gi[:, H:2 * H], gi[:, 2 * H:]
        gh_r, gh_z, gh_n = gh[:, :H], gh[:, H:2 * H], gh[:, 2 * H:]
        r = jax.nn.sigmoid(gi_r + gh_r)
        z = jax.nn.sigmoid(gi_z + gh_z)
        n = jnp.tanh(gi_n + r * gh_n)
        h_new = (1.0 - z) * n + z * h
        return h_new, None

    h0 = jnp.zeros((B, H), dtype=jnp.float32)
    h_last, _ = lax.scan(step, h0, jnp.transpose(x, (1, 0, 2)))
    return h_last


if __name__ == "__main__":
    # Small shapes consistent with the module: batch=2, seq=8, embedding=32, hidden=32.
    B, T, E, H = 2, 8, 32, 32

    key = jax.random.PRNGKey(0)
    kx, k1, k2, k3, k4 = jax.random.split(key, 5)

    x = jax.random.normal(kx, (B, T, E), dtype=jnp.float32)

    # PyTorch-style uniform(-1/sqrt(H), 1/sqrt(H)) init, deterministic.
    bound = 1.0 / (H ** 0.5)
    w_ih = jax.random.uniform(k1, (3 * H, E), jnp.float32, -bound, bound)
    w_hh = jax.random.uniform(k2, (3 * H, H), jnp.float32, -bound, bound)
    b_ih = jax.random.uniform(k3, (3 * H,), jnp.float32, -bound, bound)
    b_hh = jax.random.uniform(k4, (3 * H,), jnp.float32, -bound, bound)

    fwd = jax.jit(session_encoder_forward)
    h_kernel = jax.block_until_ready(fwd(x, w_ih, w_hh, b_ih, b_hh))

    h_ref = _gru_reference(x, w_ih, w_hh, b_ih, b_hh)
    assert h_kernel.shape == (B, H)
    assert jnp.allclose(h_kernel, h_ref, atol=1e-4, rtol=1e-4), "mismatch vs reference"

    print("KERNEL_OK")
</pallas_src>

<mosaic_0001>
module attributes {stable_mosaic.version = 11 : i64} {
  func.func @_gru_kernel(%arg0: i32, %arg1: memref<64x32xf32, #tpu.memory_space<vmem>>, %arg2: memref<32x96xf32, #tpu.memory_space<vmem>>, %arg3: memref<1x96xf32, #tpu.memory_space<vmem>>, %arg4: memref<32x96xf32, #tpu.memory_space<vmem>>, %arg5: memref<1x32xf32, #tpu.memory_space<vmem>>, %arg6: memref<8x32xf32, #tpu.memory_space<vmem>>, %arg7: memref<64x96xf32, #tpu.memory_space<vmem>>) attributes {dimension_semantics = [#tpu.dimension_semantics<arbitrary>], iteration_bounds = array<i64: 1>, scalar_prefetch = 0 : i64, scratch_operands = 1 : i64, tpu.core_type = #tpu.core_type<tc>, window_params = [{pipeline_mode = #tpu.pipeline_mode<synchronous>, transform_indices = @transform_0, window_bounds = array<i64: 64, 32>}, {pipeline_mode = #tpu.pipeline_mode<synchronous>, transform_indices = @transform_1, window_bounds = array<i64: 32, 96>}, {pipeline_mode = #tpu.pipeline_mode<synchronous>, transform_indices = @transform_2, window_bounds = array<i64: 1, 96>}, {pipeline_mode = #tpu.pipeline_mode<synchronous>, transform_indices = @transform_3, window_bounds = array<i64: 32, 96>}, {pipeline_mode = #tpu.pipeline_mode<synchronous>, transform_indices = @transform_4, window_bounds = array<i64: 1, 32>}, {pipeline_mode = #tpu.pipeline_mode<synchronous>, transform_indices = @transform_5, window_bounds = array<i64: 8, 32>}]} {
    %c0 = arith.constant 0 : index
    %c0_0 = arith.constant 0 : index
    %0 = vector.load %arg1[%c0, %c0_0] : memref<64x32xf32, #tpu.memory_space<vmem>>, vector<64x32xf32>
    %c0_1 = arith.constant 0 : index
    %c0_2 = arith.constant 0 : index
    %1 = vector.load %arg2[%c0_1, %c0_2] : memref<32x96xf32, #tpu.memory_space<vmem>>, vector<32x96xf32>
    %cst = arith.constant dense<0.000000e+00> : vector<64x96xf32>
    %2 = tpu.matmul %0, %1, %cst {dimension_numbers = #tpu.dot_dimension_numbers<[1], [0], [0], [1], [0, 0, 1, 1], [], []>} : vector<64x32xf32>, vector<32x96xf32>, vector<64x96xf32> -> vector<64x96xf32>
    %c0_3 = arith.constant 0 : index
    %c0_4 = arith.constant 0 : index
    %3 = vector.load %arg3[%c0_3, %c0_4] : memref<1x96xf32, #tpu.memory_space<vmem>>, vector<1x96xf32>
    %4 = vector.broadcast %3 : vector<1x96xf32> to vector<64x96xf32>
    %5 = arith.addf %2, %4 : vector<64x96xf32>
    %c0_5 = arith.constant 0 : index
    %c0_6 = arith.constant 0 : index
    %6 = vector.load %arg7[%c0_5, %c0_6] : memref<64x96xf32, #tpu.memory_space<vmem>>, vector<64x96xf32>
    tpu.vector_store %arg7[%c0_5, %c0_6], %5 {strides = array<i32>} : memref<64x96xf32, #tpu.memory_space<vmem>>, vector<64x96xf32>,
    %c0_7 = arith.constant 0 : index
    %c0_8 = arith.constant 0 : index
    %7 = vector.load %arg4[%c0_7, %c0_8] : memref<32x96xf32, #tpu.memory_space<vmem>>, vector<32x96xf32>
    %c0_9 = arith.constant 0 : index
    %c0_10 = arith.constant 0 : index
    %8 = vector.load %arg5[%c0_9, %c0_10] : memref<1x32xf32, #tpu.memory_space<vmem>>, vector<1x32xf32>
    %cst_11 = arith.constant 0.000000e+00 : f32
    %9 = vector.broadcast %cst_11 : f32 to vector<8x32xf32>
    %c0_12 = arith.constant 0 : index
    %c0_13 = arith.constant 0 : index
    %10 = vector.load %arg7[%c0_12, %c0_13] : memref<64x96xf32, #tpu.memory_space<vmem>>, vector<8x96xf32>
    %cst_14 = arith.constant dense<0.000000e+00> : vector<8x96xf32>
    %11 = tpu.matmul %9, %7, %cst_14 {dimension_numbers = #tpu.dot_dimension_numbers<[1], [0], [0], [1], [0, 0, 1, 1], [], []>} : vector<8x32xf32>, vector<32x96xf32>, vector<8x96xf32> -> vector<8x96xf32>
    %12 = vector.extract_strided_slice %10 {offsets = [0, 0], sizes = [8, 32], strides = [1, 1]} : vector<8x96xf32> to vector<8x32xf32>
    %13 = vector.extract_strided_slice %11 {offsets = [0, 0], sizes = [8, 32], strides = [1, 1]} : vector<8x96xf32> to vector<8x32xf32>
    %14 = arith.addf %12, %13 : vector<8x32xf32>
    %15 = arith.negf %14 : vector<8x32xf32>
    %16 = math.exp %15 : vector<8x32xf32>
    %cst_15 = arith.constant 1.000000e+00 : f32
    %17 = vector.broadcast %cst_15 : f32 to vector<8x32xf32>
    %18 = arith.addf %17, %16 : vector<8x32xf32>
    %19 = arith.divf %17, %18 : vector<8x32xf32>
    %20 = vector.extract_strided_slice %10 {offsets = [0, 32], sizes = [8, 32], strides = [1, 1]} : vector<8x96xf32> to vector<8x32xf32>
    %21 = vector.extract_strided_slice %11 {offsets = [0, 32], sizes = [8, 32], strides = [1, 1]} : vector<8x96xf32> to vector<8x32xf32>
    %22 = arith.addf %20, %21 : vector<8x32xf32>
    %23 = arith.negf %22 : vector<8x32xf32>
    %24 = math.exp %23 : vector<8x32xf32>
    %cst_16 = arith.constant 1.000000e+00 : f32
    %25 = vector.broadcast %cst_16 : f32 to vector<8x32xf32>
    %26 = arith.addf %25, %24 : vector<8x32xf32>
    %27 = arith.divf %25, %26 : vector<8x32xf32>
    %28 = vector.extract_strided_slice %10 {offsets = [0, 64], sizes = [8, 32], strides = [1, 1]} : vector<8x96xf32> to vector<8x32xf32>
    %29 = vector.extract_strided_slice %11 {offsets = [0, 64], sizes = [8, 32], strides = [1, 1]} : vector<8x96xf32> to vector<8x32xf32>
    %30 = vector.broadcast %8 : vector<1x32xf32> to vector<8x32xf32>
    %31 = arith.addf %29, %30 : vector<8x32xf32>
    %32 = arith.mulf %19, %31 : vector<8x32xf32>
    %33 = arith.addf %28, %32 : vector<8x32xf32>
    %34 = math.tanh %33 : vector<8x32xf32>
    %cst_17 = arith.constant 1.000000e+00 : f32
    %35 = vector.broadcast %cst_17 : f32 to vector<8x32xf32>
    %36 = arith.subf %35, %27 : vector<8x32xf32>
    %37 = arith.mulf %36, %34 : vector<8x32xf32>
    %38 = arith.mulf %27, %9 : vector<8x32xf32>
    %39 = arith.addf %37, %38 : vector<8x32xf32>
    %c8 = arith.constant 8 : index
    %c0_18 = arith.constant 0 : index
    %40 = vector.load %arg7[%c8, %c0_18] : memref<64x96xf32, #tpu.memory_space<vmem>>, vector<8x96xf32>
    %cst_19 = arith.constant dense<0.000000e+00> : vector<8x96xf32>
    %41 = tpu.matmul %39, %7, %cst_19 {dimension_numbers = #tpu.dot_dimension_numbers<[1], [0], [0], [1], [0, 0, 1, 1], [], []>} : vector<8x32xf32>, vector<32x96xf32>, vector<8x96xf32> -> vector<8x96xf32>
    %42 = vector.extract_strided_slice %40 {offsets = [0, 0], sizes = [8, 32], strides = [1, 1]} : vector<8x96xf32> to vector<8x32xf32>
    %43 = vector.extract_strided_slice %41 {offsets = [0, 0], sizes = [8, 32], strides = [1, 1]} : vector<8x96xf32> to vector<8x32xf32>
    %44 = arith.addf %42, %43 : vector<8x32xf32>
    %45 = arith.negf %44 : vector<8x32xf32>
    %46 = math.exp %45 : vector<8x32xf32>
    %cst_20 = arith.constant 1.000000e+00 : f32
    %47 = vector.broadcast %cst_20 : f32 to vector<8x32xf32>
    %48 = arith.addf %47, %46 : vector<8x32xf32>
    %49 = arith.divf %47, %48 : vector<8x32xf32>
    %50 = vector.extract_strided_slice %40 {offsets = [0, 32], sizes = [8, 32], strides = [1, 1]} : vector<8x96xf32> to vector<8x32xf32>
    %51 = vector.extract_strided_slice %41 {offsets = [0, 32], sizes = [8, 32], strides = [1, 1]} : vector<8x96xf32> to vector<8x32xf32>
    %52 = arith.addf %50, %51 : vector<8x32xf32>
    %53 = arith.negf %52 : vector<8x32xf32>
    %54 = math.exp %53 : vector<8x32xf32>
    %cst_21 = arith.constant 1.000000e+00 : f32
    %55 = vector.broadcast %cst_21 : f32 to vector<8x32xf32>
    %56 = arith.addf %55, %54 : vector<8x32xf32>
    %57 = arith.divf %55, %56 : vector<8x32xf32>
    %58 = vector.extract_strided_slice %40 {offsets = [0, 64], sizes = [8, 32], strides = [1, 1]} : vector<8x96xf32> to vector<8x32xf32>
    %59 = vector.extract_strided_slice %41 {offsets = [0, 64], sizes = [8, 32], strides = [1, 1]} : vector<8x96xf32> to vector<8x32xf32>
    %60 = vector.broadcast %8 : vector<1x32xf32> to vector<8x32xf32>
    %61 = arith.addf %59, %60 : vector<8x32xf32>
    %62 = arith.mulf %49, %61 : vector<8x32xf32>
    %63 = arith.addf %58, %62 : vector<8x32xf32>
    %64 = math.tanh %63 : vector<8x32xf32>
    %cst_22 = arith.constant 1.000000e+00 : f32
    %65 = vector.broadcast %cst_22 : f32 to vector<8x32xf32>
    %66 = arith.subf %65, %57 : vector<8x32xf32>
    %67 = arith.mulf %66, %64 : vector<8x32xf32>
    %68 = arith.mulf %57, %39 : vector<8x32xf32>
    %69 = arith.addf %67, %68 : vector<8x32xf32>
    %c16 = arith.constant 16 : index
    %c0_23 = arith.constant 0 : index
    %70 = vector.load %arg7[%c16, %c0_23] : memref<64x96xf32, #tpu.memory_space<vmem>>, vector<8x96xf32>
    %cst_24 = arith.constant dense<0.000000e+00> : vector<8x96xf32>
    %71 = tpu.matmul %69, %7, %cst_24 {dimension_numbers = #tpu.dot_dimension_numbers<[1], [0], [0], [1], [0, 0, 1, 1], [], []>} : vector<8x32xf32>, vector<32x96xf32>, vector<8x96xf32> -> vector<8x96xf32>
    %72 = vector.extract_strided_slice %70 {offsets = [0, 0], sizes = [8, 32], strides = [1, 1]} : vector<8x96xf32> to vector<8x32xf32>
    %73 = vector.extract_strided_slice %71 {offsets = [0, 0], sizes = [8, 32], strides = [1, 1]} : vector<8x96xf32> to vector<8x32xf32>
    %74 = arith.addf %72, %73 : vector<8x32xf32>
    %75 = arith.negf %74 : vector<8x32xf32>
    %76 = math.exp %75 : vector<8x32xf32>
    %cst_25 = arith.constant 1.000000e+00 : f32
    %77 = vector.broadcast %cst_25 : f32 to vector<8x32xf32>
    %78 = arith.addf %77, %76 : vector<8x32xf32>
    %79 = arith.divf %77, %78 : vector<8x32xf32>
    %80 = vector.extract_strided_slice %70 {offsets = [0, 32], sizes = [8, 32], strides = [1, 1]} : vector<8x96xf32> to vector<8x32xf32>
    %81 = vector.extract_strided_slice %71 {offsets = [0, 32], sizes = [8, 32], strides = [1, 1]} : vector<8x96xf32> to vector<8x32xf32>
    %82 = arith.addf %80, %81 : vector<8x32xf32>
    %83 = arith.negf %82 : vector<8x32xf32>
    %84 = math.exp %83 : vector<8x32xf32>
    %cst_26 = arith.constant 1.000000e+00 : f32
    %85 = vector.broadcast %cst_26 : f32 to vector<8x32xf32>
    %86 = arith.addf %85, %84 : vector<8x32xf32>
    %87 = arith.divf %85, %86 : vector<8x32xf32>
    %88 = vector.extract_strided_slice %70 {offsets = [0, 64], sizes = [8, 32], strides = [1, 1]} : vector<8x96xf32> to vector<8x32xf32>
    %89 = vector.extract_strided_slice %71 {offsets = [0, 64], sizes = [8, 32], strides = [1, 1]} : vector<8x96xf32> to vector<8x32xf32>
    %90 = vector.broadcast %8 : vector<1x32xf32> to vector<8x32xf32>
    %91 = arith.addf %89, %90 : vector<8x32xf32>
    %92 = arith.mulf %79, %91 : vector<8x32xf32>
    %93 = arith.addf %88, %92 : vector<8x32xf32>
    %94 = math.tanh %93 : vector<8x32xf32>
    %cst_27 = arith.constant 1.000000e+00 : f32
    %95 = vector.broadcast %cst_27 : f32 to vector<8x32xf32>
    %96 = arith.subf %95, %87 : vector<8x32xf32>
    %97 = arith.mulf %96, %94 : vector<8x32xf32>
    %98 = arith.mulf %87, %69 : vector<8x32xf32>
    %99 = arith.addf %97, %98 : vector<8x32xf32>
    %c24 = arith.constant 24 : index
    %c0_28 = arith.constant 0 : index
    %100 = vector.load %arg7[%c24, %c0_28] : memref<64x96xf32, #tpu.memory_space<vmem>>, vector<8x96xf32>
    %cst_29 = arith.constant dense<0.000000e+00> : vector<8x96xf32>
    %101 = tpu.matmul %99, %7, %cst_29 {dimension_numbers = #tpu.dot_dimension_numbers<[1], [0], [0], [1], [0, 0, 1, 1], [], []>} : vector<8x32xf32>, vector<32x96xf32>, vector<8x96xf32> -> vector<8x96xf32>
    %102 = vector.extract_strided_slice %100 {offsets = [0, 0], sizes = [8, 32], strides = [1, 1]} : vector<8x96xf32> to vector<8x32xf32>
    %103 = vector.extract_strided_slice %101 {offsets = [0, 0], sizes = [8, 32], strides = [1, 1]} : vector<8x96xf32> to vector<8x32xf32>
    %104 = arith.addf %102, %103 : vector<8x32xf32>
    %105 = arith.negf %104 : vector<8x32xf32>
    %106 = math.exp %105 : vector<8x32xf32>
    %cst_30 = arith.constant 1.000000e+00 : f32
    %107 = vector.broadcast %cst_30 : f32 to vector<8x32xf32>
    %108 = arith.addf %107, %106 : vector<8x32xf32>
    %109 = arith.divf %107, %108 : vector<8x32xf32>
    %110 = vector.extract_strided_slice %100 {offsets = [0, 32], sizes = [8, 32], strides = [1, 1]} : vector<8x96xf32> to vector<8x32xf32>
    %111 = vector.extract_strided_slice %101 {offsets = [0, 32], sizes = [8, 32], strides = [1, 1]} : vector<8x96xf32> to vector<8x32xf32>
    %112 = arith.addf %110, %111 : vector<8x32xf32>
    %113 = arith.negf %112 : vector<8x32xf32>
    %114 = math.exp %113 : vector<8x32xf32>
    %cst_31 = arith.constant 1.000000e+00 : f32
    %115 = vector.broadcast %cst_31 : f32 to vector<8x32xf32>
    %116 = arith.addf %115, %114 : vector<8x32xf32>
    %117 = arith.divf %115, %116 : vector<8x32xf32>
    %118 = vector.extract_strided_slice %100 {offsets = [0, 64], sizes = [8, 32], strides = [1, 1]} : vector<8x96xf32> to vector<8x32xf32>
    %119 = vector.extract_strided_slice %101 {offsets = [0, 64], sizes = [8, 32], strides = [1, 1]} : vector<8x96xf32> to vector<8x32xf32>
    %120 = vector.broadcast %8 : vector<1x32xf32> to vector<8x32xf32>
    %121 = arith.addf %119, %120 : vector<8x32xf32>
    %122 = arith.mulf %109, %121 : vector<8x32xf32>
    %123 = arith.addf %118, %122 : vector<8x32xf32>
    %124 = math.tanh %123 : vector<8x32xf32>
    %cst_32 = arith.constant 1.000000e+00 : f32
    %125 = vector.broadcast %cst_32 : f32 to vector<8x32xf32>
    %126 = arith.subf %125, %117 : vector<8x32xf32>
    %127 = arith.mulf %126, %124 : vector<8x32xf32>
    %128 = arith.mulf %117, %99 : vector<8x32xf32>
    %129 = arith.addf %127, %128 : vector<8x32xf32>
    %c32 = arith.constant 32 : index
    %c0_33 = arith.constant 0 : index
    %130 = vector.load %arg7[%c32, %c0_33] : memref<64x96xf32, #tpu.memory_space<vmem>>, vector<8x96xf32>
    %cst_34 = arith.constant dense<0.000000e+00> : vector<8x96xf32>
    %131 = tpu.matmul %129, %7, %cst_34 {dimension_numbers = #tpu.dot_dimension_numbers<[1], [0], [0], [1], [0, 0, 1, 1], [], []>} : vector<8x32xf32>, vector<32x96xf32>, vector<8x96xf32> -> vector<8x96xf32>
    %132 = vector.extract_strided_slice %130 {offsets = [0, 0], sizes = [8, 32], strides = [1, 1]} : vector<8x96xf32> to vector<8x32xf32>
    %133 = vector.extract_strided_slice %131 {offsets = [0, 0], sizes = [8, 32], strides = [1, 1]} : vector<8x96xf32> to vector<8x32xf32>
    %134 = arith.addf %132, %133 : vector<8x32xf32>
    %135 = arith.negf %134 : vector<8x32xf32>
    %136 = math.exp %135 : vector<8x32xf32>
    %cst_35 = arith.constant 1.000000e+00 : f32
    %137 = vector.broadcast %cst_35 : f32 to vector<8x32xf32>
    %138 = arith.addf %137, %136 : vector<8x32xf32>
    %139 = arith.divf %137, %138 : vector<8x32xf32>
    %140 = vector.extract_strided_slice %130 {offsets = [0, 32], sizes = [8, 32], strides = [1, 1]} : vector<8x96xf32> to vector<8x32xf32>
    %141 = vector.extract_strided_slice %131 {offsets = [0, 32], sizes = [8, 32], strides = [1, 1]} : vector<8x96xf32> to vector<8x32xf32>
    %142 = arith.addf %140, %141 : vector<8x32xf32>
    %143 = arith.negf %142 : vector<8x32xf32>
    %144 = math.exp %143 : vector<8x32xf32>
    %cst_36 = arith.constant 1.000000e+00 : f32
    %145 = vector.broadcast %cst_36 : f32 to vector<8x32xf32>
    %146 = arith.addf %145, %144 : vector<8x32xf32>
    %147 = arith.divf %145, %146 : vector<8x32xf32>
    %148 = vector.extract_strided_slice %130 {offsets = [0, 64], sizes = [8, 32], strides = [1, 1]} : vector<8x96xf32> to vector<8x32xf32>
    %149 = vector.extract_strided_slice %131 {offsets = [0, 64], sizes = [8, 32], strides = [1, 1]} : vector<8x96xf32> to vector<8x32xf32>
    %150 = vector.broadcast %8 : vector<1x32xf32> to vector<8x32xf32>
    %151 = arith.addf %149, %150 : vector<8x32xf32>
    %152 = arith.mulf %139, %151 : vector<8x32xf32>
    %153 = arith.addf %148, %152 : vector<8x32xf32>
    %154 = math.tanh %153 : vector<8x32xf32>
    %cst_37 = arith.constant 1.000000e+00 : f32
    %155 = vector.broadcast %cst_37 : f32 to vector<8x32xf32>
    %156 = arith.subf %155, %147 : vector<8x32xf32>
    %157 = arith.mulf %156, %154 : vector<8x32xf32>
    %158 = arith.mulf %147, %129 : vector<8x32xf32>
    %159 = arith.addf %157, %158 : vector<8x32xf32>
    %c40 = arith.constant 40 : index
    %c0_38 = arith.constant 0 : index
    %160 = vector.load %arg7[%c40, %c0_38] : memref<64x96xf32, #tpu.memory_space<vmem>>, vector<8x96xf32>
    %cst_39 = arith.constant dense<0.000000e+00> : vector<8x96xf32>
    %161 = tpu.matmul %159, %7, %cst_39 {dimension_numbers = #tpu.dot_dimension_numbers<[1], [0], [0], [1], [0, 0, 1, 1], [], []>} : vector<8x32xf32>, vector<32x96xf32>, vector<8x96xf32> -> vector<8x96xf32>
    %162 = vector.extract_strided_slice %160 {offsets = [0, 0], sizes = [8, 32], strides = [1, 1]} : vector<8x96xf32> to vector<8x32xf32>
    %163 = vector.extract_strided_slice %161 {offsets = [0, 0], sizes = [8, 32], strides = [1, 1]} : vector<8x96xf32> to vector<8x32xf32>
    %164 = arith.addf %162, %163 : vector<8x32xf32>
    %165 = arith.negf %164 : vector<8x32xf32>
    %166 = math.exp %165 : vector<8x32xf32>
    %cst_40 = arith.constant 1.000000e+00 : f32
    %167 = vector.broadcast %cst_40 : f32 to vector<8x32xf32>
    %168 = arith.addf %167, %166 : vector<8x32xf32>
    %169 = arith.divf %167, %168 : vector<8x32xf32>
    %170 = vector.extract_strided_slice %160 {offsets = [0, 32], sizes = [8, 32], strides = [1, 1]} : vector<8x96xf32> to vector<8x32xf32>
    %171 = vector.extract_strided_slice %161 {offsets = [0, 32], sizes = [8, 32], strides = [1, 1]} : vector<8x96xf32> to vector<8x32xf32>
    %172 = arith.addf %170, %171 : vector<8x32xf32>
    %173 = arith.negf %172 : vector<8x32xf32>
    %174 = math.exp %173 : vector<8x32xf32>
    %cst_41 = arith.constant 1.000000e+00 : f32
    %175 = vector.broadcast %cst_41 : f32 to vector<8x32xf32>
    %176 = arith.addf %175, %174 : vector<8x32xf32>
    %177 = arith.divf %175, %176 : vector<8x32xf32>
    %178 = vector.extract_strided_slice %160 {offsets = [0, 64], sizes = [8, 32], strides = [1, 1]} : vector<8x96xf32> to vector<8x32xf32>
    %179 = vector.extract_strided_slice %161 {offsets = [0, 64], sizes = [8, 32], strides = [1, 1]} : vector<8x96xf32> to vector<8x32xf32>
    %180 = vector.broadcast %8 : vector<1x32xf32> to vector<8x32xf32>
    %181 = arith.addf %179, %180 : vector<8x32xf32>
    %182 = arith.mulf %169, %181 : vector<8x32xf32>
    %183 = arith.addf %178, %182 : vector<8x32xf32>
    %184 = math.tanh %183 : vector<8x32xf32>
    %cst_42 = arith.constant 1.000000e+00 : f32
    %185 = vector.broadcast %cst_42 : f32 to vector<8x32xf32>
    %186 = arith.subf %185, %177 : vector<8x32xf32>
    %187 = arith.mulf %186, %184 : vector<8x32xf32>
    %188 = arith.mulf %177, %159 : vector<8x32xf32>
    %189 = arith.addf %187, %188 : vector<8x32xf32>
    %c48 = arith.constant 48 : index
    %c0_43 = arith.constant 0 : index
    %190 = vector.load %arg7[%c48, %c0_43] : memref<64x96xf32, #tpu.memory_space<vmem>>, vector<8x96xf32>
    %cst_44 = arith.constant dense<0.000000e+00> : vector<8x96xf32>
    %191 = tpu.matmul %189, %7, %cst_44 {dimension_numbers = #tpu.dot_dimension_numbers<[1], [0], [0], [1], [0, 0, 1, 1], [], []>} : vector<8x32xf32>, vector<32x96xf32>, vector<8x96xf32> -> vector<8x96xf32>
    %192 = vector.extract_strided_slice %190 {offsets = [0, 0], sizes = [8, 32], strides = [1, 1]} : vector<8x96xf32> to vector<8x32xf32>
    %193 = vector.extract_strided_slice %191 {offsets = [0, 0], sizes = [8, 32], strides = [1, 1]} : vector<8x96xf32> to vector<8x32xf32>
    %194 = arith.addf %192, %193 : vector<8x32xf32>
    %195 = arith.negf %194 : vector<8x32xf32>
    %196 = math.exp %195 : vector<8x32xf32>
    %cst_45 = arith.constant 1.000000e+00 : f32
    %197 = vector.broadcast %cst_45 : f32 to vector<8x32xf32>
    %198 = arith.addf %197, %196 : vector<8x32xf32>
    %199 = arith.divf %197, %198 : vector<8x32xf32>
    %200 = vector.extract_strided_slice %190 {offsets = [0, 32], sizes = [8, 32], strides = [1, 1]} : vector<8x96xf32> to vector<8x32xf32>
    %201 = vector.extract_strided_slice %191 {offsets = [0, 32], sizes = [8, 32], strides = [1, 1]} : vector<8x96xf32> to vector<8x32xf32>
    %202 = arith.addf %200, %201 : vector<8x32xf32>
    %203 = arith.negf %202 : vector<8x32xf32>
    %204 = math.exp %203 : vector<8x32xf32>
    %cst_46 = arith.constant 1.000000e+00 : f32
    %205 = vector.broadcast %cst_46 : f32 to vector<8x32xf32>
    %206 = arith.addf %205, %204 : vector<8x32xf32>
    %207 = arith.divf %205, %206 : vector<8x32xf32>
    %208 = vector.extract_strided_slice %190 {offsets = [0, 64], sizes = [8, 32], strides = [1, 1]} : vector<8x96xf32> to vector<8x32xf32>
    %209 = vector.extract_strided_slice %191 {offsets = [0, 64], sizes = [8, 32], strides = [1, 1]} : vector<8x96xf32> to vector<8x32xf32>
    %210 = vector.broadcast %8 : vector<1x32xf32> to vector<8x32xf32>
    %211 = arith.addf %209, %210 : vector<8x32xf32>
    %212 = arith.mulf %199, %211 : vector<8x32xf32>
    %213 = arith.addf %208, %212 : vector<8x32xf32>
    %214 = math.tanh %213 : vector<8x32xf32>
    %cst_47 = arith.constant 1.000000e+00 : f32
    %215 = vector.broadcast %cst_47 : f32 to vector<8x32xf32>
    %216 = arith.subf %215, %207 : vector<8x32xf32>
    %217 = arith.mulf %216, %214 : vector<8x32xf32>
    %218 = arith.mulf %207, %189 : vector<8x32xf32>
    %219 = arith.addf %217, %218 : vector<8x32xf32>
    %c56 = arith.constant 56 : index
    %c0_48 = arith.constant 0 : index
    %220 = vector.load %arg7[%c56, %c0_48] : memref<64x96xf32, #tpu.memory_space<vmem>>, vector<8x96xf32>
    %cst_49 = arith.constant dense<0.000000e+00> : vector<8x96xf32>
    %221 = tpu.matmul %219, %7, %cst_49 {dimension_numbers = #tpu.dot_dimension_numbers<[1], [0], [0], [1], [0, 0, 1, 1], [], []>} : vector<8x32xf32>, vector<32x96xf32>, vector<8x96xf32> -> vector<8x96xf32>
    %222 = vector.extract_strided_slice %220 {offsets = [0, 0], sizes = [8, 32], strides = [1, 1]} : vector<8x96xf32> to vector<8x32xf32>
    %223 = vector.extract_strided_slice %221 {offsets = [0, 0], sizes = [8, 32], strides = [1, 1]} : vector<8x96xf32> to vector<8x32xf32>
    %224 = arith.addf %222, %223 : vector<8x32xf32>
    %225 = arith.negf %224 : vector<8x32xf32>
    %226 = math.exp %225 : vector<8x32xf32>
    %cst_50 = arith.constant 1.000000e+00 : f32
    %227 = vector.broadcast %cst_50 : f32 to vector<8x32xf32>
    %228 = arith.addf %227, %226 : vector<8x32xf32>
    %229 = arith.divf %227, %228 : vector<8x32xf32>
    %230 = vector.extract_strided_slice %220 {offsets = [0, 32], sizes = [8, 32], strides = [1, 1]} : vector<8x96xf32> to vector<8x32xf32>
    %231 = vector.extract_strided_slice %221 {offsets = [0, 32], sizes = [8, 32], strides = [1, 1]} : vector<8x96xf32> to vector<8x32xf32>
    %232 = arith.addf %230, %231 : vector<8x32xf32>
    %233 = arith.negf %232 : vector<8x32xf32>
    %234 = math.exp %233 : vector<8x32xf32>
    %cst_51 = arith.constant 1.000000e+00 : f32
    %235 = vector.broadcast %cst_51 : f32 to vector<8x32xf32>
    %236 = arith.addf %235, %234 : vector<8x32xf32>
    %237 = arith.divf %235, %236 : vector<8x32xf32>
    %238 = vector.extract_strided_slice %220 {offsets = [0, 64], sizes = [8, 32], strides = [1, 1]} : vector<8x96xf32> to vector<8x32xf32>
    %239 = vector.extract_strided_slice %221 {offsets = [0, 64], sizes = [8, 32], strides = [1, 1]} : vector<8x96xf32> to vector<8x32xf32>
    %240 = vector.broadcast %8 : vector<1x32xf32> to vector<8x32xf32>
    %241 = arith.addf %239, %240 : vector<8x32xf32>
    %242 = arith.mulf %229, %241 : vector<8x32xf32>
    %243 = arith.addf %238, %242 : vector<8x32xf32>
    %244 = math.tanh %243 : vector<8x32xf32>
    %cst_52 = arith.constant 1.000000e+00 : f32
    %245 = vector.broadcast %cst_52 : f32 to vector<8x32xf32>
    %246 = arith.subf %245, %237 : vector<8x32xf32>
    %247 = arith.mulf %246, %244 : vector<8x32xf32>
    %248 = arith.mulf %237, %219 : vector<8x32xf32>
    %249 = arith.addf %247, %248 : vector<8x32xf32>
    %c0_53 = arith.constant 0 : index
    %c0_54 = arith.constant 0 : index
    %250 = vector.load %arg6[%c0_53, %c0_54] : memref<8x32xf32, #tpu.memory_space<vmem>>, vector<8x32xf32>
    tpu.vector_store %arg6[%c0_53, %c0_54], %249 {strides = array<i32>} : memref<8x32xf32, #tpu.memory_space<vmem>>, vector<8x32xf32>,
    return
  }
  func.func @transform_0(%arg0: i32) -> (i32, i32) {
    %c0_i32 = arith.constant 0 : i32
    %c0_i32_0 = arith.constant 0 : i32
    %c0_i32_1 = arith.constant 0 : i32
    return %c0_i32, %c0_i32_0 : i32, i32
  }
  func.func @transform_1(%arg0: i32) -> (i32, i32) {
    %c0_i32 = arith.constant 0 : i32
    %c0_i32_0 = arith.constant 0 : i32
    %c0_i32_1 = arith.constant 0 : i32
    return %c0_i32, %c0_i32_0 : i32, i32
  }
  func.func @transform_2(%arg0: i32) -> (i32, i32) {
    %c0_i32 = arith.constant 0 : i32
    %c0_i32_0 = arith.constant 0 : i32
    %c0_i32_1 = arith.constant 0 : i32
    return %c0_i32, %c0_i32_0 : i32, i32
  }
  func.func @transform_3(%arg0: i32) -> (i32, i32) {
    %c0_i32 = arith.constant 0 : i32
    %c0_i32_0 = arith.constant 0 : i32
    %c0_i32_1 = arith.constant 0 : i32
    return %c0_i32, %c0_i32_0 : i32, i32
  }
  func.func @transform_4(%arg0: i32) -> (i32, i32) {
    %c0_i32 = arith.constant 0 : i32
    %c0_i32_0 = arith.constant 0 : i32
    %c0_i32_1 = arith.constant 0 : i32
    return %c0_i32, %c0_i32_0 : i32, i32
  }
  func.func @transform_5(%arg0: i32) -> (i32, i32) {
    %c0_i32 = arith.constant 0 : i32
    %c0_i32_0 = arith.constant 0 : i32
    %c0_i32_1 = arith.constant 0 : i32
    return %c0_i32, %c0_i32_0 : i32, i32
  }
}

</mosaic_0001>

<llo_original>
// kernel: session_encoder_forward.1
$region0: #{session_encoder_forward.1}
  #allocation0 [shape = 'u32[]', space=smem, size = 0x4, offset = 0x4, fixed_abs, tag = 'smem constant byte address 0x4 - core index']
  #allocation1 [shape = 'u32[144,128]{1,0:T(1,128)}', space=vmem, size = 0x12000, scoped, tag = 'internal scratch']
  #allocation2 [shape = 'f32[64,96]{1,0:T(8,128)}', space=vmem, size = 0x8000, scoped, tag = 'scratch operand']
  %s0 = inlined_call_operand.vmem [shape: f32[64,32], index: 0, kind: input, shape index: {}]
  %s1 = inlined_call_operand.vmem [shape: f32[32,96], index: 1, kind: input, shape index: {}]
  %s2 = inlined_call_operand.vmem [shape: f32[1,96], index: 2, kind: input, shape index: {}]
  %s3 = inlined_call_operand.vmem [shape: f32[32,96], index: 3, kind: input, shape index: {}]
  %s4 = inlined_call_operand.vmem [shape: f32[1,32], index: 4, kind: input, shape index: {}]
  %s5 = inlined_call_operand.vmem [shape: f32[8,32], index: 5, kind: output, shape index: {}]
  %s6 = sld [smem:[#allocation0]]
  $region30: #{session_encoder_forward.1} parent=0
    _
  %s8 = ssub.s32 1, %s6
  %s9 = scalar_select 0, %s8, %s6
  // Predicated region
  $region2: #{session_encoder_forward.1} parent=0 // pred_check
    _
  $region3: #{session_encoder_forward.1} parent=0 // pred_check_branch
    %11 = sbr.rel (0) target = $region5
  $region4: #{session_encoder_forward.1} parent=0 // pred_region
    _
  $region5: #{session_encoder_forward.1} parent=0 // pred_fallthru
    _
  // Predicated region
  $region6: #{session_encoder_forward.1} parent=0 // pred_check
    _
  $region7: #{session_encoder_forward.1} parent=0 // pred_check_branch
    %13 = sbr.rel (0) target = $region9
  $region8: #{session_encoder_forward.1} parent=0 // pred_region
    _
  $region9: #{session_encoder_forward.1} parent=0 // pred_fallthru
    _
  // Predicated region
  $region10: #{session_encoder_forward.1} parent=0 // pred_check
    _
  $region11: #{session_encoder_forward.1} parent=0 // pred_check_branch
    %15 = sbr.rel (0) target = $region13
  $region12: #{session_encoder_forward.1} parent=0 // pred_region
    _
  $region13: #{session_encoder_forward.1} parent=0 // pred_fallthru
    _
  // Predicated region
  $region14: #{session_encoder_forward.1} parent=0 // pred_check
    _
  $region15: #{session_encoder_forward.1} parent=0 // pred_check_branch
    %17 = sbr.rel (0) target = $region17
  $region16: #{session_encoder_forward.1} parent=0 // pred_region
    _
  $region17: #{session_encoder_forward.1} parent=0 // pred_fallthru
    _
  // Predicated region
  $region18: #{session_encoder_forward.1} parent=0 // pred_check
    _
  $region19: #{session_encoder_forward.1} parent=0 // pred_check_branch
    %19 = sbr.rel (0) target = $region21
  $region20: #{session_encoder_forward.1} parent=0 // pred_region
    _
  $region21: #{session_encoder_forward.1} parent=0 // pred_fallthru
    _
  %v20 = vld [vmem:[%s0] sm:$0xff]
  %v21 = vld [vmem:[%s0 + $0x8] sm:$0xff]
  %v22 = vld [vmem:[%s0 + $0x10] sm:$0xff]
  %v23 = vld [vmem:[%s0 + $0x18] sm:$0xff]
  %v24 = vld [vmem:[%s0 + $0x20] sm:$0xff]
  %v25 = vld [vmem:[%s0 + $0x28] sm:$0xff]
  %v26 = vld [vmem:[%s0 + $0x30] sm:$0xff]
  %v27 = vld [vmem:[%s0 + $0x38] sm:$0xff]
  %v28 = vld [vmem:[%s1] sm:$0xff]
  %v29 = vld [vmem:[%s1 + $0x8] sm:$0xff]
  %v30 = vld [vmem:[%s1 + $0x10] sm:$0xff]
  %v31 = vld [vmem:[%s1 + $0x18] sm:$0xff]
  %v32 = vld [vmem:[%s2] sm:$0x1]
  %v34 = vlaneseq
  %v35 = vshrl.u32 %v34, 7
  %v36 = vsub.s32 0, %v35
  %v37 = vrot.slane %v32, %v36
  %vm39 = vcmask 261120
  %v41 = vsel %vm39, %v20, 0
  %v44 = vsel %vm39, %v21, 0
  %v47 = vsel %vm39, %v22, 0
  %v50 = vsel %vm39, %v23, 0
  %v53 = vsel %vm39, %v24, 0
  %v56 = vsel %vm39, %v25, 0
  %v59 = vsel %vm39, %v26, 0
  %v62 = vsel %vm39, %v27, 0
  %64 = vmatprep.subr.mxu0 0.0
  %65 = vmatpush1.msra.mxu0 %v28
  %66 = vmatprep.subr.mxu0 0.0
  %67 = vmatpush1.msra.mxu0 %v29
  %68 = vmatprep.subr.mxu0 0.0
  %69 = vmatpush1.msra.mxu0 %v30
  %70 = vmatprep.subr.mxu0 0.0
  %71 = vmatpush1.msra.mxu0 %v31
  %72 = vmatprep.subr.mxu0 0.0
  %73 = vmatpush1.msra.mxu0 0.0
  %74 = vmatprep.subr.mxu0 0.0
  %75 = vmatpush1.msra.mxu0 0.0
  %76 = vmatprep.subr.mxu0 0.0
  %77 = vmatpush1.msra.mxu0 0.0
  %78 = vmatprep.subr.mxu0 0.0
  %79 = vmatpush1.msra.mxu0 0.0
  %80 = vmatprep.subr.mxu0 0.0
  %81 = vmatpush1.msra.mxu0 0.0
  %82 = vmatprep.subr.mxu0 0.0
  %83 = vmatpush1.msra.mxu0 0.0
  %84 = vmatprep.subr.mxu0 0.0
  %85 = vmatpush1.msra.mxu0 0.0
  %86 = vmatprep.subr.mxu0 0.0
  %87 = vmatpush1.msra.mxu0 0.0
  %88 = vmatprep.subr.mxu0 0.0
  %89 = vmatpush1.msra.mxu0 0.0
  %90 = vmatprep.subr.mxu0 0.0
  %91 = vmatpush1.msra.mxu0 0.0
  %92 = vmatprep.subr.mxu0 0.0
  %93 = vmatpush1.msra.mxu0 0.0
  %94 = vmatprep.subr.mxu0 0.0
  %95 = vmatpush1.msra.mxu0 0.0
  %96 = vmatprep.subr.mxu0 0.0
  %97 = vmatpush1.msra.mxu0 0.0
  %98 = vmatprep.subr.mxu0 0.0
  %99 = vmatpush1.msra.mxu0 0.0
  %100 = vmatprep.subr.mxu0 0.0
  %101 = vmatpush1.msra.mxu0 0.0
  %102 = vmatprep.subr.mxu0 0.0
  %103 = vmatpush1.msra.mxu0 0.0
  %104 = vmatprep.subr.mxu0 0.0
  %105 = vmatpush1.msra.mxu0 0.0
  %106 = vmatprep.subr.mxu0 0.0
  %107 = vmatpush1.msra.mxu0 0.0
  %108 = vmatprep.subr.mxu0 0.0
  %109 = vmatpush1.msra.mxu0 0.0
  %110 = vmatprep.subr.mxu0 0.0
  %111 = vmatpush1.msra.mxu0 0.0
  %112 = vmatprep.subr.mxu0 0.0
  %113 = vmatpush1.msra.mxu0 0.0
  %114 = vmatprep.subr.mxu0 0.0
  %115 = vmatpush1.msra.mxu0 0.0
  %116 = vmatprep.subr.mxu0 0.0
  %117 = vmatpush1.msra.mxu0 0.0
  %118 = vmatprep.subr.mxu0 0.0
  %119 = vmatpush1.msra.mxu0 0.0
  %120 = vmatprep.subr.mxu0 0.0
  %121 = vmatpush1.msra.mxu0 0.0
  %122 = vmatprep.subr.mxu0 0.0
  %123 = vmatpush1.msra.mxu0 0.0
  %124 = vmatprep.subr.mxu0 0.0
  %125 = vmatpush1.msra.mxu0 0.0
  %126 = vmatprep.subr.mxu0 0.0
  %127 = vmatpush1.msra.mxu0 0.0
  %128 = vmatprep.mubr.f32.mxu0 0.0
  %129 = vmatmul.mubr.f32.gmra.mrb[0].mxu0 %v41
  %v130 = vpop.f32.mrb[0].mxu0
  %v131 = vadd.f32 %v37, %v130
  %v132 = vpop.f32.mrb[0].mxu0
  %133 = vmatprep.mubr.f32.mxu0 0.0
  %134 = vmatmul.mubr.f32.gmra.mrb[0].mxu0 %v44
  %v135 = vpop.f32.mrb[0].mxu0
  %v136 = vadd.f32 %v37, %v135
  %v137 = vpop.f32.mrb[0].mxu0
  %138 = vmatprep.mubr.f32.mxu0 0.0
  %139 = vmatmul.mubr.f32.gmra.mrb[0].mxu0 %v47
  %v140 = vpop.f32.mrb[0].mxu0
  %v141 = vadd.f32 %v37, %v140
  %v142 = vpop.f32.mrb[0].mxu0
  %143 = vmatprep.mubr.f32.mxu0 0.0
  %144 = vmatmul.mubr.f32.gmra.mrb[0].mxu0 %v50
  %v145 = vpop.f32.mrb[0].mxu0
  %v146 = vadd.f32 %v37, %v145
  %v147 = vpop.f32.mrb[0].mxu0
  %148 = vmatprep.mubr.f32.mxu0 0.0
  %149 = vmatmul.mubr.f32.gmra.mrb[0].mxu0 %v53
  %v150 = vpop.f32.mrb[0].mxu0
  %v151 = vadd.f32 %v37, %v150
  %v152 = vpop.f32.mrb[0].mxu0
  %153 = vmatprep.mubr.f32.mxu0 0.0
  %154 = vmatmul.mubr.f32.gmra.mrb[0].mxu0 %v56
  %v155 = vpop.f32.mrb[0].mxu0
  %v156 = vadd.f32 %v37, %v155
  %v157 = vpop.f32.mrb[0].mxu0
  %158 = vmatprep.mubr.f32.mxu0 0.0
  %159 = vmatmul.mubr.f32.gmra.mrb[0].mxu0 %v59
  %v160 = vpop.f32.mrb[0].mxu0
  %v161 = vadd.f32 %v37, %v160
  %v162 = vpop.f32.mrb[0].mxu0
  %163 = vmatprep.mubr.f32.mxu0 0.0
  %164 = vmatmul.mubr.f32.gmra.mrb[0].mxu0 %v62
  %v165 = vpop.f32.mrb[0].mxu0
  %v166 = vadd.f32 %v37, %v165
  %v167 = vpop.f32.mrb[0].mxu0
  %168 = vdwg.mxu0
  %vm169 = vcmask 785408
  %170 = vst.msk [vmem:[#allocation2] sm:$0xff] %vm169, %v131
  %171 = vst.msk [vmem:[#allocation2 + $0x8] sm:$0xff] %vm169, %v136
  %172 = vst.msk [vmem:[#allocation2 + $0x10] sm:$0xff] %vm169, %v141
  %173 = vst.msk [vmem:[#allocation2 + $0x18] sm:$0xff] %vm169, %v146
  %174 = vst.msk [vmem:[#allocation2 + $0x20] sm:$0xff] %vm169, %v151
  %175 = vst.msk [vmem:[#allocation2 + $0x28] sm:$0xff] %vm169, %v156
  %176 = vst.msk [vmem:[#allocation2 + $0x30] sm:$0xff] %vm169, %v161
  %177 = vst.msk [vmem:[#allocation2 + $0x38] sm:$0xff] %vm169, %v166
  %v178 = vld [vmem:[%s3] sm:$0xff]
  %v179 = vld [vmem:[%s3 + $0x8] sm:$0xff]
  %v180 = vld [vmem:[%s3 + $0x10] sm:$0xff]
  %v181 = vld [vmem:[%s3 + $0x18] sm:$0xff]
  %v182 = vld [vmem:[%s4] sm:$0x1]
  %v183 = vld [vmem:[#allocation2] sm:$0xff]
  %v185 = vsel %vm39, 0.0, 0
  %187 = vmatprep.subr.mxu0 0.0
  %188 = vmatpush1.msra.mxu0 %v178
  %189 = vmatprep.subr.mxu0 0.0
  %190 = vmatpush1.msra.mxu0 %v179
  %191 = vmatprep.subr.mxu0 0.0
  %192 = vmatpush1.msra.mxu0 %v180
  %193 = vmatprep.subr.mxu0 0.0
  %194 = vmatpush1.msra.mxu0 %v181
  %195 = vmatprep.subr.mxu0 0.0
  %196 = vmatpush1.msra.mxu0 0.0
  %197 = vmatprep.subr.mxu0 0.0
  %198 = vmatpush1.msra.mxu0 0.0
  %199 = vmatprep.subr.mxu0 0.0
  %200 = vmatpush1.msra.mxu0 0.0
  %201 = vmatprep.subr.mxu0 0.0
  %202 = vmatpush1.msra.mxu0 0.0
  %203 = vmatprep.subr.mxu0 0.0
  %204 = vmatpush1.msra.mxu0 0.0
  %205 = vmatprep.subr.mxu0 0.0
  %206 = vmatpush1.msra.mxu0 0.0
  %207 = vmatprep.subr.mxu0 0.0
  %208 = vmatpush1.msra.mxu0 0.0
  %209 = vmatprep.subr.mxu0 0.0
  %210 = vmatpush1.msra.mxu0 0.0
  %211 = vmatprep.subr.mxu0 0.0
  %212 = vmatpush1.msra.mxu0 0.0
  %213 = vmatprep.subr.mxu0 0.0
  %214 = vmatpush1.msra.mxu0 0.0
  %215 = vmatprep.subr.mxu0 0.0
  %216 = vmatpush1.msra.mxu0 0.0
  %217 = vmatprep.subr.mxu0 0.0
  %218 = vmatpush1.msra.mxu0 0.0
  %219 = vmatprep.subr.mxu0 0.0
  %220 = vmatpush1.msra.mxu0 0.0
  %221 = vmatprep.subr.mxu0 0.0
  %222 = vmatpush1.msra.mxu0 0.0
  %223 = vmatprep.subr.mxu0 0.0
  %224 = vmatpush1.msra.mxu0 0.0
  %225 = vmatprep.subr.mxu0 0.0
  %226 = vmatpush1.msra.mxu0 0.0
  %227 = vmatprep.subr.mxu0 0.0
  %228 = vmatpush1.msra.mxu0 0.0
  %229 = vmatprep.subr.mxu0 0.0
  %230 = vmatpush1.msra.mxu0 0.0
  %231 = vmatprep.subr.mxu0 0.0
  %232 = vmatpush1.msra.mxu0 0.0
  %233 = vmatprep.subr.mxu0 0.0
  %234 = vmatpush1.msra.mxu0 0.0
  %235 = vmatprep.subr.mxu0 0.0
  %236 = vmatpush1.msra.mxu0 0.0
  %237 = vmatprep.subr.mxu0 0.0
  %238 = vmatpush1.msra.mxu0 0.0
  %239 = vmatprep.subr.mxu0 0.0
  %240 = vmatpush1.msra.mxu0 0.0
  %241 = vmatprep.subr.mxu0 0.0
  %242 = vmatpush1.msra.mxu0 0.0
  %243 = vmatprep.subr.mxu0 0.0
  %244 = vmatpush1.msra.mxu0 0.0
  %245 = vmatprep.subr.mxu0 0.0
  %246 = vmatpush1.msra.mxu0 0.0
  %247 = vmatprep.subr.mxu0 0.0
  %248 = vmatpush1.msra.mxu0 0.0
  %249 = vmatprep.subr.mxu0 0.0
  %250 = vmatpush1.msra.mxu0 0.0
  %251 = vmatprep.mubr.f32.mxu0 0.0
  %252 = vmatmul.mubr.f32.gmra.mrb[0].mxu0 %v185
  %v253 = vpop.f32.mrb[0].mxu0
  %v254 = vadd.f32 0.0, %v253
  %v255 = vpop.f32.mrb[0].mxu0
  %256 = vdwg.mxu0
  %v257 = vadd.f32 %v183, %v254
  %v258 = vxor.u32 %v257, 2147483648
  %v259 = vmul.f32 %v258, 1.442695
  %v260 = vpow.pop %v259
  %v261 = vadd.f32 %v260, 1.0
  %v262 = vrcp.pop %v261
  %v263 = vmul.f32 1.0, %v262
  %v265 = vlaneseq
  %v266 = vshrl.u32 %v265, 7
  %v267 = vsub.s32 0, %v266
  %v268 = vrot.slane %v182, %v267
  %269 = vrot.lane.b32.xlu0 %v268, 64
  %v270 = vpop.permute.xlu0 %269
  %v272 = vadd.f32 %v254, %v270
  %274 = vrot.lane.b32.xlu0 %v272, 64
  %v275 = vpop.permute.xlu0 %274
  %v277 = vmul.f32 %v263, %v275
  %279 = vrot.lane.b32.xlu0 %v277, 64
  %v280 = vpop.permute.xlu0 %279
  %v282 = vadd.f32 %v183, %v280
  %v283 = vtanh.pop %v282
  %v284 = vsub.f32 1.0, %v263
  %286 = vrot.lane.b32.xlu0 %v283, 96
  %v287 = vpop.permute.xlu0 %286
  %v289 = vmul.f32 %v284, %v287
  %v290 = vmul.f32 %v263, 0.0
  %v291 = vadd.f32 %v289, %v290
  %v292 = vld [vmem:[#allocation2 + $0x8] sm:$0xff]
  %294 = vrot.lane.b32.xlu0 %v291, 96
  %v295 = vpop.permute.xlu0 %294
  %v296 = vsel %vm39, %v295, 0
  %298 = vmatprep.subr.mxu0 0.0
  %299 = vmatpush1.msra.mxu0 %v178
  %300 = vmatprep.subr.mxu0 0.0
  %301 = vmatpush1.msra.mxu0 %v179
  %302 = vmatprep.subr.mxu0 0.0
  %303 = vmatpush1.msra.mxu0 %v180
  %304 = vmatprep.subr.mxu0 0.0
  %305 = vmatpush1.msra.mxu0 %v181
  %306 = vmatprep.subr.mxu0 0.0
  %307 = vmatpush1.msra.mxu0 0.0
  %308 = vmatprep.subr.mxu0 0.0
  %309 = vmatpush1.msra.mxu0 0.0
  %310 = vmatprep.subr.mxu0 0.0
  %311 = vmatpush1.msra.mxu0 0.0
  %312 = vmatprep.subr.mxu0 0.0
  %313 = vmatpush1.msra.mxu0 0.0
  %314 = vmatprep.subr.mxu0 0.0
  %315 = vmatpush1.msra.mxu0 0.0
  %316 = vmatprep.subr.mxu0 0.0
  %317 = vmatpush1.msra.mxu0 0.0
  %318 = vmatprep.subr.mxu0 0.0
  %319 = vmatpush1.msra.mxu0 0.0
  %320 = vmatprep.subr.mxu0 0.0
  %321 = vmatpush1.msra.mxu0 0.0
  %322 = vmatprep.subr.mxu0 0.0
  %323 = vmatpush1.msra.mxu0 0.0
  %324 = vmatprep.subr.mxu0 0.0
  %325 = vmatpush1.msra.mxu0 0.0
  %326 = vmatprep.subr.mxu0 0.0
  %327 = vmatpush1.msra.mxu0 0.0
  %328 = vmatprep.subr.mxu0 0.0
  %329 = vmatpush1.msra.mxu0 0.0
  %330 = vmatprep.subr.mxu0 0.0
  %331 = vmatpush1.msra.mxu0 0.0
  %332 = vmatprep.subr.mxu0 0.0
  %333 = vmatpush1.msra.mxu0 0.0
  %334 = vmatprep.subr.mxu0 0.0
  %335 = vmatpush1.msra.mxu0 0.0
  %336 = vmatprep.subr.mxu0 0.0
  %337 = vmatpush1.msra.mxu0 0.0
  %338 = vmatprep.subr.mxu0 0.0
  %339 = vmatpush1.msra.mxu0 0.0
  %340 = vmatprep.subr.mxu0 0.0
  %341 = vmatpush1.msra.mxu0 0.0
  %342 = vmatprep.subr.mxu0 0.0
  %343 = vmatpush1.msra.mxu0 0.0
  %344 = vmatprep.subr.mxu0 0.0
  %345 = vmatpush1.msra.mxu0 0.0
  %346 = vmatprep.subr.mxu0 0.0
  %347 = vmatpush1.msra.mxu0 0.0
  %348 = vmatprep.subr.mxu0 0.0
  %349 = vmatpush1.msra.mxu0 0.0
  %350 = vmatprep.subr.mxu0 0.0
  %351 = vmatpush1.msra.mxu0 0.0
  %352 = vmatprep.subr.mxu0 0.0
  %353 = vmatpush1.msra.mxu0 0.0
  %354 = vmatprep.subr.mxu0 0.0
  %355 = vmatpush1.msra.mxu0 0.0
  %356 = vmatprep.subr.mxu0 0.0
  %357 = vmatpush1.msra.mxu0 0.0
  %358 = vmatprep.subr.mxu0 0.0
  %359 = vmatpush1.msra.mxu0 0.0
  %360 = vmatprep.subr.mxu0 0.0
  %361 = vmatpush1.msra.mxu0 0.0
  %362 = vmatprep.mubr.f32.mxu0 0.0
  %363 = vmatmul.mubr.f32.gmra.mrb[0].mxu0 %v296
  %v364 = vpop.f32.mrb[0].mxu0
  %v365 = vadd.f32 0.0, %v364
  %v366 = vpop.f32.mrb[0].mxu0
  %367 = vdwg.mxu0
  %v368 = vadd.f32 %v292, %v365
  %v369 = vxor.u32 %v368, 2147483648
  %v370 = vmul.f32 %v369, 1.442695
  %v371 = vpow.pop %v370
  %v372 = vadd.f32 %v371, 1.0
  %v373 = vrcp.pop %v372
  %v374 = vmul.f32 1.0, %v373
  %v375 = vadd.f32 %v365, %v270
  %377 = vrot.lane.b32.xlu0 %v375, 64
  %v378 = vpop.permute.xlu0 %377
  %v380 = vmul.f32 %v374, %v378
  %382 = vrot.lane.b32.xlu0 %v380, 64
  %v383 = vpop.permute.xlu0 %382
  %v385 = vadd.f32 %v292, %v383
  %v386 = vtanh.pop %v385
  %v387 = vsub.f32 1.0, %v374
  %389 = vrot.lane.b32.xlu0 %v386, 96
  %v390 = vpop.permute.xlu0 %389
  %v392 = vmul.f32 %v387, %v390
  %v393 = vmul.f32 %v374, %v291
  %v394 = vadd.f32 %v392, %v393
  %v395 = vld [vmem:[#allocation2 + $0x10] sm:$0xff]
  %397 = vrot.lane.b32.xlu0 %v394, 96
  %v398 = vpop.permute.xlu0 %397
  %v399 = vsel %vm39, %v398, 0
  %401 = vmatprep.subr.mxu0 0.0
  %402 = vmatpush1.msra.mxu0 %v178
  %403 = vmatprep.subr.mxu0 0.0
  %404 = vmatpush1.msra.mxu0 %v179
  %405 = vmatprep.subr.mxu0 0.0
  %406 = vmatpush1.msra.mxu0 %v180
  %407 = vmatprep.subr.mxu0 0.0
  %408 = vmatpush1.msra.mxu0 %v181
  %409 = vmatprep.subr.mxu0 0.0
  %410 = vmatpush1.msra.mxu0 0.0
  %411 = vmatprep.subr.mxu0 0.0
  %412 = vmatpush1.msra.mxu0 0.0
  %413 = vmatprep.subr.mxu0 0.0
  %414 = vmatpush1.msra.mxu0 0.0
  %415 = vmatprep.subr.mxu0 0.0
  %416 = vmatpush1.msra.mxu0 0.0
  %417 = vmatprep.subr.mxu0 0.0
  %418 = vmatpush1.msra.mxu0 0.0
  %419 = vmatprep.subr.mxu0 0.0
  %420 = vmatpush1.msra.mxu0 0.0
  %421 = vmatprep.subr.mxu0 0.0
  %422 = vmatpush1.msra.mxu0 0.0
  %423 = vmatprep.subr.mxu0 0.0
  %424 = vmatpush1.msra.mxu0 0.0
  %425 = vmatprep.subr.mxu0 0.0
  %426 = vmatpush1.msra.mxu0 0.0
  %427 = vmatprep.subr.mxu0 0.0
  %428 = vmatpush1.msra.mxu0 0.0
  %429 = vmatprep.subr.mxu0 0.0
  %430 = vmatpush1.msra.mxu0 0.0
  %431 = vmatprep.subr.mxu0 0.0
  %432 = vmatpush1.msra.mxu0 0.0
  %433 = vmatprep.subr.mxu0 0.0
  %434 = vmatpush1.msra.mxu0 0.0
  %435 = vmatprep.subr.mxu0 0.0
  %436 = vmatpush1.msra.mxu0 0.0
  %437 = vmatprep.subr.mxu0 0.0
  %438 = vmatpush1.msra.mxu0 0.0
  %439 = vmatprep.subr.mxu0 0.0
  %440 = vmatpush1.msra.mxu0 0.0
  %441 = vmatprep.subr.mxu0 0.0
  %442 = vmatpush1.msra.mxu0 0.0
  %443 = vmatprep.subr.mxu0 0.0
  %444 = vmatpush1.msra.mxu0 0.0
  %445 = vmatprep.subr.mxu0 0.0
  %446 = vmatpush1.msra.mxu0 0.0
  %447 = vmatprep.subr.mxu0 0.0
  %448 = vmatpush1.msra.mxu0 0.0
  %449 = vmatprep.subr.mxu0 0.0
  %450 = vmatpush1.msra.mxu0 0.0
  %451 = vmatprep.subr.mxu0 0.0
  %452 = vmatpush1.msra.mxu0 0.0
  %453 = vmatprep.subr.mxu0 0.0
  %454 = vmatpush1.msra.mxu0 0.0
  %455 = vmatprep.subr.mxu0 0.0
  %456 = vmatpush1.msra.mxu0 0.0
  %457 = vmatprep.subr.mxu0 0.0
  %458 = vmatpush1.msra.mxu0 0.0
  %459 = vmatprep.subr.mxu0 0.0
  %460 = vmatpush1.msra.mxu0 0.0
  %461 = vmatprep.subr.mxu0 0.0
  %462 = vmatpush1.msra.mxu0 0.0
  %463 = vmatprep.subr.mxu0 0.0
  %464 = vmatpush1.msra.mxu0 0.0
  %465 = vmatprep.mubr.f32.mxu0 0.0
  %466 = vmatmul.mubr.f32.gmra.mrb[0].mxu0 %v399
  %v467 = vpop.f32.mrb[0].mxu0
  %v468 = vadd.f32 0.0, %v467
  %v469 = vpop.f32.mrb[0].mxu0
  %470 = vdwg.mxu0
  %v471 = vadd.f32 %v395, %v468
  %v472 = vxor.u32 %v471, 2147483648
  %v473 = vmul.f32 %v472, 1.442695
  %v474 = vpow.pop %v473
  %v475 = vadd.f32 %v474, 1.0
  %v476 = vrcp.pop %v475
  %v477 = vmul.f32 1.0, %v476
  %v478 = vadd.f32 %v468, %v270
  %480 = vrot.lane.b32.xlu0 %v478, 64
  %v481 = vpop.permute.xlu0 %480
  %v483 = vmul.f32 %v477, %v481
  %485 = vrot.lane.b32.xlu0 %v483, 64
  %v486 = vpop.permute.xlu0 %485
  %v488 = vadd.f32 %v395, %v486
  %v489 = vtanh.pop %v488
  %v490 = vsub.f32 1.0, %v477
  %492 = vrot.lane.b32.xlu0 %v489, 96
  %v493 = vpop.permute.xlu0 %492
  %v495 = vmul.f32 %v490, %v493
  %v496 = vmul.f32 %v477, %v394
  %v497 = vadd.f32 %v495, %v496
  %v498 = vld [vmem:[#allocation2 + $0x18] sm:$0xff]
  %500 = vrot.lane.b32.xlu0 %v497, 96
  %v501 = vpop.permute.xlu0 %500
  %v502 = vsel %vm39, %v501, 0
  %504 = vmatprep.subr.mxu0 0.0
  %505 = vmatpush1.msra.mxu0 %v178
  %506 = vmatprep.subr.mxu0 0.0
  %507 = vmatpush1.msra.mxu0 %v179
  %508 = vmatprep.subr.mxu0 0.0
  %509 = vmatpush1.msra.mxu0 %v180
  %510 = vmatprep.subr.mxu0 0.0
  %511 = vmatpush1.msra.mxu0 %v181
  %512 = vmatprep.subr.mxu0 0.0
  %513 = vmatpush1.msra.mxu0 0.0
  %514 = vmatprep.subr.mxu0 0.0
  %515 = vmatpush1.msra.mxu0 0.0
  %516 = vmatprep.subr.mxu0 0.0
  %517 = vmatpush1.msra.mxu0 0.0
  %518 = vmatprep.subr.mxu0 0.0
  %519 = vmatpush1.msra.mxu0 0.0
  %520 = vmatprep.subr.mxu0 0.0
  %521 = vmatpush1.msra.mxu0 0.0
  %522 = vmatprep.subr.mxu0 0.0
  %523 = vmatpush1.msra.mxu0 0.0
  %524 = vmatprep.subr.mxu0 0.0
  %525 = vmatpush1.msra.mxu0 0.0
  %526 = vmatprep.subr.mxu0 0.0
  %527 = vmatpush1.msra.mxu0 0.0
  %528 = vmatprep.subr.mxu0 0.0
  %529 = vmatpush1.msra.mxu0 0.0
  %530 = vmatprep.subr.mxu0 0.0
  %531 = vmatpush1.msra.mxu0 0.0
  %532 = vmatprep.subr.mxu0 0.0
  %533 = vmatpush1.msra.mxu0 0.0
  %534 = vmatprep.subr.mxu0 0.0
  %535 = vmatpush1.msra.mxu0 0.0
  %536 = vmatprep.subr.mxu0 0.0
  %537 = vmatpush1.msra.mxu0 0.0
  %538 = vmatprep.subr.mxu0 0.0
  %539 = vmatpush1.msra.mxu0 0.0
  %540 = vmatprep.subr.mxu0 0.0
  %541 = vmatpush1.msra.mxu0 0.0
  %542 = vmatprep.subr.mxu0 0.0
  %543 = vmatpush1.msra.mxu0 0.0
  %544 = vmatprep.subr.mxu0 0.0
  %545 = vmatpush1.msra.mxu0 0.0
  %546 = vmatprep.subr.mxu0 0.0
  %547 = vmatpush1.msra.mxu0 0.0
  %548 = vmatprep.subr.mxu0 0.0
  %549 = vmatpush1.msra.mxu0 0.0
  %550 = vmatprep.subr.mxu0 0.0
  %551 = vmatpush1.msra.mxu0 0.0
  %552 = vmatprep.subr.mxu0 0.0
  %553 = vmatpush1.msra.mxu0 0.0
  %554 = vmatprep.subr.mxu0 0.0
  %555 = vmatpush1.msra.mxu0 0.0
  %556 = vmatprep.subr.mxu0 0.0
  %557 = vmatpush1.msra.mxu0 0.0
  %558 = vmatprep.subr.mxu0 0.0
  %559 = vmatpush1.msra.mxu0 0.0
  %560 = vmatprep.subr.mxu0 0.0
  %561 = vmatpush1.msra.mxu0 0.0
  %562 = vmatprep.subr.mxu0 0.0
  %563 = vmatpush1.msra.mxu0 0.0
  %564 = vmatprep.subr.mxu0 0.0
  %565 = vmatpush1.msra.mxu0 0.0
  %566 = vmatprep.subr.mxu0 0.0
  %567 = vmatpush1.msra.mxu0 0.0
  %568 = vmatprep.mubr.f32.mxu0 0.0
  %569 = vmatmul.mubr.f32.gmra.mrb[0].mxu0 %v502
  %v570 = vpop.f32.mrb[0].mxu0
  %v571 = vadd.f32 0.0, %v570
  %v572 = vpop.f32.mrb[0].mxu0
  %573 = vdwg.mxu0
  %v574 = vadd.f32 %v498, %v571
  %v575 = vxor.u32 %v574, 2147483648
  %v576 = vmul.f32 %v575, 1.442695
  %v577 = vpow.pop %v576
  %v578 = vadd.f32 %v577, 1.0
  %v579 = vrcp.pop %v578
  %v580 = vmul.f32 1.0, %v579
  %v581 = vadd.f32 %v571, %v270
  %583 = vrot.lane.b32.xlu0 %v581, 64
  %v584 = vpop.permute.xlu0 %583
  %v586 = vmul.f32 %v580, %v584
  %588 = vrot.lane.b32.xlu0 %v586, 64
  %v589 = vpop.permute.xlu0 %588
  %v591 = vadd.f32 %v498, %v589
  %v592 = vtanh.pop %v591
  %v593 = vsub.f32 1.0, %v580
  %595 = vrot.lane.b32.xlu0 %v592, 96
  %v596 = vpop.permute.xlu0 %595
  %v598 = vmul.f32 %v593, %v596
  %v599 = vmul.f32 %v580, %v497
  %v600 = vadd.f32 %v598, %v599
  %v601 = vld [vmem:[#allocation2 + $0x20] sm:$0xff]
  %603 = vrot.lane.b32.xlu0 %v600, 96
  %v604 = vpop.permute.xlu0 %603
  %v605 = vsel %vm39, %v604, 0
  %607 = vmatprep.subr.mxu0 0.0
  %608 = vmatpush1.msra.mxu0 %v178
  %609 = vmatprep.subr.mxu0 0.0
  %610 = vmatpush1.msra.mxu0 %v179
  %611 = vmatprep.subr.mxu0 0.0
  %612 = vmatpush1.msra.mxu0 %v180
  %613 = vmatprep.subr.mxu0 0.0
  %614 = vmatpush1.msra.mxu0 %v181
  %615 = vmatprep.subr.mxu0 0.0
  %616 = vmatpush1.msra.mxu0 0.0
  %617 = vmatprep.subr.mxu0 0.0
  %618 = vmatpush1.msra.mxu0 0.0
  %619 = vmatprep.subr.mxu0 0.0
  %620 = vmatpush1.msra.mxu0 0.0
  %621 = vmatprep.subr.mxu0 0.0
  %622 = vmatpush1.msra.mxu0 0.0
  %623 = vmatprep.subr.mxu0 0.0
  %624 = vmatpush1.msra.mxu0 0.0
  %625 = vmatprep.subr.mxu0 0.0
  %626 = vmatpush1.msra.mxu0 0.0
  %627 = vmatprep.subr.mxu0 0.0
  %628 = vmatpush1.msra.mxu0 0.0
  %629 = vmatprep.subr.mxu0 0.0
  %630 = vmatpush1.msra.mxu0 0.0
  %631 = vmatprep.subr.mxu0 0.0
  %632 = vmatpush1.msra.mxu0 0.0
  %633 = vmatprep.subr.mxu0 0.0
  %634 = vmatpush1.msra.mxu0 0.0
  %635 = vmatprep.subr.mxu0 0.0
  %636 = vmatpush1.msra.mxu0 0.0
  %637 = vmatprep.subr.mxu0 0.0
  %638 = vmatpush1.msra.mxu0 0.0
  %639 = vmatprep.subr.mxu0 0.0
  %640 = vmatpush1.msra.mxu0 0.0
  %641 = vmatprep.subr.mxu0 0.0
  %642 = vmatpush1.msra.mxu0 0.0
  %643 = vmatprep.subr.mxu0 0.0
  %644 = vmatpush1.msra.mxu0 0.0
  %645 = vmatprep.subr.mxu0 0.0
  %646 = vmatpush1.msra.mxu0 0.0
  %647 = vmatprep.subr.mxu0 0.0
  %648 = vmatpush1.msra.mxu0 0.0
  %649 = vmatprep.subr.mxu0 0.0
  %650 = vmatpush1.msra.mxu0 0.0
  %651 = vmatprep.subr.mxu0 0.0
  %652 = vmatpush1.msra.mxu0 0.0
  %653 = vmatprep.subr.mxu0 0.0
  %654 = vmatpush1.msra.mxu0 0.0
  %655 = vmatprep.subr.mxu0 0.0
  %656 = vmatpush1.msra.mxu0 0.0
  %657 = vmatprep.subr.mxu0 0.0
  %658 = vmatpush1.msra.mxu0 0.0
  %659 = vmatprep.subr.mxu0 0.0
  %660 = vmatpush1.msra.mxu0 0.0
  %661 = vmatprep.subr.mxu0 0.0
  %662 = vmatpush1.msra.mxu0 0.0
  %663 = vmatprep.subr.mxu0 0.0
  %664 = vmatpush1.msra.mxu0 0.0
  %665 = vmatprep.subr.mxu0 0.0
  %666 = vmatpush1.msra.mxu0 0.0
  %667 = vmatprep.subr.mxu0 0.0
  %668 = vmatpush1.msra.mxu0 0.0
  %669 = vmatprep.subr.mxu0 0.0
  %670 = vmatpush1.msra.mxu0 0.0
  %671 = vmatprep.mubr.f32.mxu0 0.0
  %672 = vmatmul.mubr.f32.gmra.mrb[0].mxu0 %v605
  %v673 = vpop.f32.mrb[0].mxu0
  %v674 = vadd.f32 0.0, %v673
  %v675 = vpop.f32.mrb[0].mxu0
  %676 = vdwg.mxu0
  %v677 = vadd.f32 %v601, %v674
  %v678 = vxor.u32 %v677, 2147483648
  %v679 = vmul.f32 %v678, 1.442695
  %v680 = vpow.pop %v679
  %v681 = vadd.f32 %v680, 1.0
  %v682 = vrcp.pop %v681
  %v683 = vmul.f32 1.0, %v682
  %v684 = vadd.f32 %v674, %v270
  %686 = vrot.lane.b32.xlu0 %v684, 64
  %v687 = vpop.permute.xlu0 %686
  %v689 = vmul.f32 %v683, %v687
  %691 = vrot.lane.b32.xlu0 %v689, 64
  %v692 = vpop.permute.xlu0 %691
  %v694 = vadd.f32 %v601, %v692
  %v695 = vtanh.pop %v694
  %v696 = vsub.f32 1.0, %v683
  %698 = vrot.lane.b32.xlu0 %v695, 96
  %v699 = vpop.permute.xlu0 %698
  %v701 = vmul.f32 %v696, %v699
  %v702 = vmul.f32 %v683, %v600
  %v703 = vadd.f32 %v701, %v702
  %v704 = vld [vmem:[#allocation2 + $0x28] sm:$0xff]
  %706 = vrot.lane.b32.xlu0 %v703, 96
  %v707 = vpop.permute.xlu0 %706
  %v708 = vsel %vm39, %v707, 0
  %710 = vmatprep.subr.mxu0 0.0
  %711 = vmatpush1.msra.mxu0 %v178
  %712 = vmatprep.subr.mxu0 0.0
  %713 = vmatpush1.msra.mxu0 %v179
  %714 = vmatprep.subr.mxu0 0.0
  %715 = vmatpush1.msra.mxu0 %v180
  %716 = vmatprep.subr.mxu0 0.0
  %717 = vmatpush1.msra.mxu0 %v181
  %718 = vmatprep.subr.mxu0 0.0
  %719 = vmatpush1.msra.mxu0 0.0
  %720 = vmatprep.subr.mxu0 0.0
  %721 = vmatpush1.msra.mxu0 0.0
  %722 = vmatprep.subr.mxu0 0.0
  %723 = vmatpush1.msra.mxu0 0.0
  %724 = vmatprep.subr.mxu0 0.0
  %725 = vmatpush1.msra.mxu0 0.0
  %726 = vmatprep.subr.mxu0 0.0
  %727 = vmatpush1.msra.mxu0 0.0
  %728 = vmatprep.subr.mxu0 0.0
  %729 = vmatpush1.msra.mxu0 0.0
  %730 = vmatprep.subr.mxu0 0.0
  %731 = vmatpush1.msra.mxu0 0.0
  %732 = vmatprep.subr.mxu0 0.0
  %733 = vmatpush1.msra.mxu0 0.0
  %734 = vmatprep.subr.mxu0 0.0
  %735 = vmatpush1.msra.mxu0 0.0
  %736 = vmatprep.subr.mxu0 0.0
  %737 = vmatpush1.msra.mxu0 0.0
  %738 = vmatprep.subr.mxu0 0.0
  %739 = vmatpush1.msra.mxu0 0.0
  %740 = vmatprep.subr.mxu0 0.0
  %741 = vmatpush1.msra.mxu0 0.0
  %742 = vmatprep.subr.mxu0 0.0
  %743 = vmatpush1.msra.mxu0 0.0
  %744 = vmatprep.subr.mxu0 0.0
  %745 = vmatpush1.msra.mxu0 0.0
  %746 = vmatprep.subr.mxu0 0.0
  %747 = vmatpush1.msra.mxu0 0.0
  %748 = vmatprep.subr.mxu0 0.0
  %749 = vmatpush1.msra.mxu0 0.0
  %750 = vmatprep.subr.mxu0 0.0
  %751 = vmatpush1.msra.mxu0 0.0
  %752 = vmatprep.subr.mxu0 0.0
  %753 = vmatpush1.msra.mxu0 0.0
  %754 = vmatprep.subr.mxu0 0.0
  %755 = vmatpush1.msra.mxu0 0.0
  %756 = vmatprep.subr.mxu0 0.0
  %757 = vmatpush1.msra.mxu0 0.0
  %758 = vmatprep.subr.mxu0 0.0
  %759 = vmatpush1.msra.mxu0 0.0
  %760 = vmatprep.subr.mxu0 0.0
  %761 = vmatpush1.msra.mxu0 0.0
  %762 = vmatprep.subr.mxu0 0.0
  %763 = vmatpush1.msra.mxu0 0.0
  %764 = vmatprep.subr.mxu0 0.0
  %765 = vmatpush1.msra.mxu0 0.0
  %766 = vmatprep.subr.mxu0 0.0
  %767 = vmatpush1.msra.mxu0 0.0
  %768 = vmatprep.subr.mxu0 0.0
  %769 = vmatpush1.msra.mxu0 0.0
  %770 = vmatprep.subr.mxu0 0.0
  %771 = vmatpush1.msra.mxu0 0.0
  %772 = vmatprep.subr.mxu0 0.0
  %773 = vmatpush1.msra.mxu0 0.0
  %774 = vmatprep.mubr.f32.mxu0 0.0
  %775 = vmatmul.mubr.f32.gmra.mrb[0].mxu0 %v708
  %v776 = vpop.f32.mrb[0].mxu0
  %v777 = vadd.f32 0.0, %v776
  %v778 = vpop.f32.mrb[0].mxu0
  %779 = vdwg.mxu0
  %v780 = vadd.f32 %v704, %v777
  %v781 = vxor.u32 %v780, 2147483648
  %v782 = vmul.f32 %v781, 1.442695
  %v783 = vpow.pop %v782
  %v784 = vadd.f32 %v783, 1.0
  %v785 = vrcp.pop %v784
  %v786 = vmul.f32 1.0, %v785
  %v787 = vadd.f32 %v777, %v270
  %789 = vrot.lane.b32.xlu0 %v787, 64
  %v790 = vpop.permute.xlu0 %789
  %v792 = vmul.f32 %v786, %v790
  %794 = vrot.lane.b32.xlu0 %v792, 64
  %v795 = vpop.permute.xlu0 %794
  %v797 = vadd.f32 %v704, %v795
  %v798 = vtanh.pop %v797
  %v799 = vsub.f32 1.0, %v786
  %801 = vrot.lane.b32.xlu0 %v798, 96
  %v802 = vpop.permute.xlu0 %801
  %v804 = vmul.f32 %v799, %v802
  %v805 = vmul.f32 %v786, %v703
  %v806 = vadd.f32 %v804, %v805
  %v807 = vld [vmem:[#allocation2 + $0x30] sm:$0xff]
  %809 = vrot.lane.b32.xlu0 %v806, 96
  %v810 = vpop.permute.xlu0 %809
  %v811 = vsel %vm39, %v810, 0
  %813 = vmatprep.subr.mxu0 0.0
  %814 = vmatpush1.msra.mxu0 %v178
  %815 = vmatprep.subr.mxu0 0.0
  %816 = vmatpush1.msra.mxu0 %v179
  %817 = vmatprep.subr.mxu0 0.0
  %818 = vmatpush1.msra.mxu0 %v180
  %819 = vmatprep.subr.mxu0 0.0
  %820 = vmatpush1.msra.mxu0 %v181
  %821 = vmatprep.subr.mxu0 0.0
  %822 = vmatpush1.msra.mxu0 0.0
  %823 = vmatprep.subr.mxu0 0.0
  %824 = vmatpush1.msra.mxu0 0.0
  %825 = vmatprep.subr.mxu0 0.0
  %826 = vmatpush1.msra.mxu0 0.0
  %827 = vmatprep.subr.mxu0 0.0
  %828 = vmatpush1.msra.mxu0 0.0
  %829 = vmatprep.subr.mxu0 0.0
  %830 = vmatpush1.msra.mxu0 0.0
  %831 = vmatprep.subr.mxu0 0.0
  %832 = vmatpush1.msra.mxu0 0.0
  %833 = vmatprep.subr.mxu0 0.0
  %834 = vmatpush1.msra.mxu0 0.0
  %835 = vmatprep.subr.mxu0 0.0
  %836 = vmatpush1.msra.mxu0 0.0
  %837 = vmatprep.subr.mxu0 0.0
  %838 = vmatpush1.msra.mxu0 0.0
  %839 = vmatprep.subr.mxu0 0.0
  %840 = vmatpush1.msra.mxu0 0.0
  %841 = vmatprep.subr.mxu0 0.0
  %842 = vmatpush1.msra.mxu0 0.0
  %843 = vmatprep.subr.mxu0 0.0
  %844 = vmatpush1.msra.mxu0 0.0
  %845 = vmatprep.subr.mxu0 0.0
  %846 = vmatpush1.msra.mxu0 0.0
  %847 = vmatprep.subr.mxu0 0.0
  %848 = vmatpush1.msra.mxu0 0.0
  %849 = vmatprep.subr.mxu0 0.0
  %850 = vmatpush1.msra.mxu0 0.0
  %851 = vmatprep.subr.mxu0 0.0
  %852 = vmatpush1.msra.mxu0 0.0
  %853 = vmatprep.subr.mxu0 0.0
  %854 = vmatpush1.msra.mxu0 0.0
  %855 = vmatprep.subr.mxu0 0.0
  %856 = vmatpush1.msra.mxu0 0.0
  %857 = vmatprep.subr.mxu0 0.0
  %858 = vmatpush1.msra.mxu0 0.0
  %859 = vmatprep.subr.mxu0 0.0
  %860 = vmatpush1.msra.mxu0 0.0
  %861 = vmatprep.subr.mxu0 0.0
  %862 = vmatpush1.msra.mxu0 0.0
  %863 = vmatprep.subr.mxu0 0.0
  %864 = vmatpush1.msra.mxu0 0.0
  %865 = vmatprep.subr.mxu0 0.0
  %866 = vmatpush1.msra.mxu0 0.0
  %867 = vmatprep.subr.mxu0 0.0
  %868 = vmatpush1.msra.mxu0 0.0
  %869 = vmatprep.subr.mxu0 0.0
  %870 = vmatpush1.msra.mxu0 0.0
  %871 = vmatprep.subr.mxu0 0.0
  %872 = vmatpush1.msra.mxu0 0.0
  %873 = vmatprep.subr.mxu0 0.0
  %874 = vmatpush1.msra.mxu0 0.0
  %875 = vmatprep.subr.mxu0 0.0
  %876 = vmatpush1.msra.mxu0 0.0
  %877 = vmatprep.mubr.f32.mxu0 0.0
  %878 = vmatmul.mubr.f32.gmra.mrb[0].mxu0 %v811
  %v879 = vpop.f32.mrb[0].mxu0
  %v880 = vadd.f32 0.0, %v879
  %v881 = vpop.f32.mrb[0].mxu0
  %882 = vdwg.mxu0
  %v883 = vadd.f32 %v807, %v880
  %v884 = vxor.u32 %v883, 2147483648
  %v885 = vmul.f32 %v884, 1.442695
  %v886 = vpow.pop %v885
  %v887 = vadd.f32 %v886, 1.0
  %v888 = vrcp.pop %v887
  %v889 = vmul.f32 1.0, %v888
  %v890 = vadd.f32 %v880, %v270
  %892 = vrot.lane.b32.xlu0 %v890, 64
  %v893 = vpop.permute.xlu0 %892
  %v895 = vmul.f32 %v889, %v893
  %897 = vrot.lane.b32.xlu0 %v895, 64
  %v898 = vpop.permute.xlu0 %897
  %v900 = vadd.f32 %v807, %v898
  %v901 = vtanh.pop %v900
  %v902 = vsub.f32 1.0, %v889
  %904 = vrot.lane.b32.xlu0 %v901, 96
  %v905 = vpop.permute.xlu0 %904
  %v907 = vmul.f32 %v902, %v905
  %v908 = vmul.f32 %v889, %v806
  %v909 = vadd.f32 %v907, %v908
  %v910 = vld [vmem:[#allocation2 + $0x38] sm:$0xff]
  %912 = vrot.lane.b32.xlu0 %v909, 96
  %v913 = vpop.permute.xlu0 %912
  %v914 = vsel %vm39, %v913, 0
  %916 = vmatprep.subr.mxu0 0.0
  %917 = vmatpush1.msra.mxu0 %v178
  %918 = vmatprep.subr.mxu0 0.0
  %919 = vmatpush1.msra.mxu0 %v179
  %920 = vmatprep.subr.mxu0 0.0
  %921 = vmatpush1.msra.mxu0 %v180
  %922 = vmatprep.subr.mxu0 0.0
  %923 = vmatpush1.msra.mxu0 %v181
  %924 = vmatprep.subr.mxu0 0.0
  %925 = vmatpush1.msra.mxu0 0.0
  %926 = vmatprep.subr.mxu0 0.0
  %927 = vmatpush1.msra.mxu0 0.0
  %928 = vmatprep.subr.mxu0 0.0
  %929 = vmatpush1.msra.mxu0 0.0
  %930 = vmatprep.subr.mxu0 0.0
  %931 = vmatpush1.msra.mxu0 0.0
  %932 = vmatprep.subr.mxu0 0.0
  %933 = vmatpush1.msra.mxu0 0.0
  %934 = vmatprep.subr.mxu0 0.0
  %935 = vmatpush1.msra.mxu0 0.0
  %936 = vmatprep.subr.mxu0 0.0
  %937 = vmatpush1.msra.mxu0 0.0
  %938 = vmatprep.subr.mxu0 0.0
  %939 = vmatpush1.msra.mxu0 0.0
  %940 = vmatprep.subr.mxu0 0.0
  %941 = vmatpush1.msra.mxu0 0.0
  %942 = vmatprep.subr.mxu0 0.0
  %943 = vmatpush1.msra.mxu0 0.0
  %944 = vmatprep.subr.mxu0 0.0
  %945 = vmatpush1.msra.mxu0 0.0
  %946 = vmatprep.subr.mxu0 0.0
  %947 = vmatpush1.msra.mxu0 0.0
  %948 = vmatprep.subr.mxu0 0.0
  %949 = vmatpush1.msra.mxu0 0.0
  %950 = vmatprep.subr.mxu0 0.0
  %951 = vmatpush1.msra.mxu0 0.0
  %952 = vmatprep.subr.mxu0 0.0
  %953 = vmatpush1.msra.mxu0 0.0
  %954 = vmatprep.subr.mxu0 0.0
  %955 = vmatpush1.msra.mxu0 0.0
  %956 = vmatprep.subr.mxu0 0.0
  %957 = vmatpush1.msra.mxu0 0.0
  %958 = vmatprep.subr.mxu0 0.0
  %959 = vmatpush1.msra.mxu0 0.0
  %960 = vmatprep.subr.mxu0 0.0
  %961 = vmatpush1.msra.mxu0 0.0
  %962 = vmatprep.subr.mxu0 0.0
  %963 = vmatpush1.msra.mxu0 0.0
  %964 = vmatprep.subr.mxu0 0.0
  %965 = vmatpush1.msra.mxu0 0.0
  %966 = vmatprep.subr.mxu0 0.0
  %967 = vmatpush1.msra.mxu0 0.0
  %968 = vmatprep.subr.mxu0 0.0
  %969 = vmatpush1.msra.mxu0 0.0
  %970 = vmatprep.subr.mxu0 0.0
  %971 = vmatpush1.msra.mxu0 0.0
  %972 = vmatprep.subr.mxu0 0.0
  %973 = vmatpush1.msra.mxu0 0.0
  %974 = vmatprep.subr.mxu0 0.0
  %975 = vmatpush1.msra.mxu0 0.0
  %976 = vmatprep.subr.mxu0 0.0
  %977 = vmatpush1.msra.mxu0 0.0
  %978 = vmatprep.subr.mxu0 0.0
  %979 = vmatpush1.msra.mxu0 0.0
  %980 = vmatprep.mubr.f32.mxu0 0.0
  %981 = vmatmul.mubr.f32.gmra.mrb[0].mxu0 %v914
  %v982 = vpop.f32.mrb[0].mxu0
  %v983 = vadd.f32 0.0, %v982
  %v984 = vpop.f32.mrb[0].mxu0
  %985 = vdwg.mxu0
  %v986 = vadd.f32 %v910, %v983
  %v987 = vxor.u32 %v986, 2147483648
  %v988 = vmul.f32 %v987, 1.442695
  %v989 = vpow.pop %v988
  %v990 = vadd.f32 %v989, 1.0
  %v991 = vrcp.pop %v990
  %v992 = vmul.f32 1.0, %v991
  %v993 = vadd.f32 %v983, %v270
  %995 = vrot.lane.b32.xlu0 %v993, 64
  %v996 = vpop.permute.xlu0 %995
  %v998 = vmul.f32 %v992, %v996
  %1000 = vrot.lane.b32.xlu0 %v998, 64
  %v1001 = vpop.permute.xlu0 %1000
  %v1003 = vadd.f32 %v910, %v1001
  %v1004 = vtanh.pop %v1003
  %v1005 = vsub.f32 1.0, %v992
  %1007 = vrot.lane.b32.xlu0 %v1004, 96
  %v1008 = vpop.permute.xlu0 %1007
  %v1010 = vmul.f32 %v1005, %v1008
  %v1011 = vmul.f32 %v992, %v909
  %v1012 = vadd.f32 %v1010, %v1011
  %1014 = vrot.lane.b32.xlu0 %v1012, 96
  %v1015 = vpop.permute.xlu0 %1014
  %1017 = vst.msk [vmem:[%s5] sm:$0xff] %vm39, %v1015
  // Predicated region
  $region22: #{session_encoder_forward.1} parent=0 // pred_check
    _
  $region23: #{session_encoder_forward.1} parent=0 // pred_check_branch
    %1019 = sbr.rel (0) target = $region25
  $region24: #{session_encoder_forward.1} parent=0 // pred_region
    _
  $region25: #{session_encoder_forward.1} parent=0 // pred_fallthru
    _
  // Predicated region
  $region26: #{session_encoder_forward.1} parent=0 // pred_check
    _
  $region27: #{session_encoder_forward.1} parent=0 // pred_check_branch
    %1021 = sbr.rel (0) target = $region29
  $region28: #{session_encoder_forward.1} parent=0 // pred_region
    _
  $region29: #{session_encoder_forward.1} parent=0 // pred_fallthru
    _

</llo_original>
